<compile_context>
chip_gen: v5e
topology: v5e:2x2
jax: 0.10.0
libtpu: 0.0.40
codegen_flags: <defaults>
</compile_context>

<pallas_src>
import jax
import jax.numpy as jnp
from jax.experimental import pallas as pl
from jax.experimental.pallas import tpu as pltpu


def _round_up(x, m):
    return (x + m - 1) // m * m


# ----------------------------------------------------------------------------
# Fused kernel
# ----------------------------------------------------------------------------
def _make_dag_lstm_kernel(num_nodes, n_layers, b_pad, hidden, max_deg):
    """Returns the fused DAG-LSTM kernel closed over static sizes."""
    H = hidden
    L = n_layers

    def kernel(pred_ref, deg_ref,                              # SMEM (prefetch)
               x_ref, wih0_ref, wih_ref, whh_ref, b_ref, s0_ref,  # VMEM inputs
               out_ref,                                        # VMEM output
               st_ref):                                        # VMEM state table
        # Slot 0 of the packed state table holds the 'inputs.0' start state.
        st_ref[0] = s0_ref[...]

        @pl.loop(0, num_nodes)
        def _node(n):
            # ---- mean-aggregate predecessor states (lane-dense full-vreg) ---
            deg = deg_ref[n]
            inv = 1.0 / jnp.maximum(deg, 1).astype(jnp.float32)
            slab = jnp.zeros((b_pad, 2 * L * H), jnp.float32)
            for k in range(max_deg):            # max_deg is tiny & static
                slot = pred_ref[n, k]           # padded entries -> slot 0, w=0
                wk = jnp.where(k < deg, inv, 0.0)
                slab = slab + wk * st_ref[slot]

            # ---- one LSTM timestep through all layers ----------------------
            layer_in = x_ref[n]                 # (b_pad, in_pad) f32
            new_h, new_c = [], []
            for layer in range(L):
                h_prev = slab[:, layer * H:(layer + 1) * H]
                c_prev = slab[:, (L + layer) * H:(L + layer + 1) * H]

                # Two accumulated MXU dots (no [x|h] concat, no zero-pad).
                if layer == 0:
                    gates = jnp.dot(layer_in.astype(jnp.bfloat16), wih0_ref[...],
                                    preferred_element_type=jnp.float32)
                else:
                    gates = jnp.dot(layer_in.astype(jnp.bfloat16), wih_ref[layer],
                                    preferred_element_type=jnp.float32)
                gates = gates + jnp.dot(h_prev.astype(jnp.bfloat16),
                                        whh_ref[layer],
                                        preferred_element_type=jnp.float32)
                gates = gates + b_ref[layer]    # bias pre-broadcast host-side

                # Gate order [i, f, o, g], g columns pre-scaled by 2:
                # one full-vreg sigmoid; tanh(z) = 2*sigmoid(2z) - 1.
                act = jax.nn.sigmoid(gates)
                i_g = act[:, 0 * H:1 * H]
                f_g = act[:, 1 * H:2 * H]
                o_g = act[:, 2 * H:3 * H]
                g_g = 2.0 * act[:, 3 * H:4 * H] - 1.0

                c_new = f_g * c_prev + i_g * g_g
                h_new = o_g * jnp.tanh(c_new)
                new_h.append(h_new)
                new_c.append(c_new)
                layer_in = h_new

            # One lane-dense (128-wide) unmasked store per node.
            st_ref[n + 1] = jnp.concatenate(new_h + new_c, axis=-1)

        # Module output = top-layer hidden state of the last node.
        out_ref[...] = st_ref[num_nodes, :, (L - 1) * H:L * H]

    return kernel


# ----------------------------------------------------------------------------
# Host-side helpers
# ----------------------------------------------------------------------------
def _build_pred_tables(dag_structure):
    """Pred slot table padded to max in-degree + in-degree counts (int32)."""
    num_nodes = len(dag_structure)
    max_deg = max(len(p) for p in dag_structure)
    assert max_deg >= 1, "every DAG node needs at least one predecessor"
    pred = [[0] * max_deg for _ in range(num_nodes)]
    deg = [0] * num_nodes
    for i, preds in enumerate(dag_structure):
        assert len(preds) >= 1, f"node {i} has no predecessors"
        deg[i] = len(preds)
        for k, p in enumerate(preds):
            if p == "inputs.0":
                pred[i][k] = 0
            else:
                p = int(p)
                assert 0 <= p < i, "dag_structure must be topologically ordered"
                pred[i][k] = p + 1
    return jnp.asarray(pred, jnp.int32), jnp.asarray(deg, jnp.int32)


def daglstm_forward(dags, dag_structure, lstm_start_state, params):
    """Mirrors DAGLSTMModule.forward (mean reduction over predecessor states)."""
    assert len(dag_structure) > 0
    assert len(dag_structure) == dags.shape[1]
    h0, c0 = lstm_start_state                      # (n_layers, B, H)
    n_layers, batch, hidden = h0.shape
    _, num_nodes, input_size = dags.shape
    b_pad = _round_up(max(batch, 8), 8)            # fp32 sublane tile
    in_pad = _round_up(input_size, 16)             # bf16 weight sublane tile

    # Node-major, batch/feature-padded inputs: (num_nodes, b_pad, in_pad).
    x = jnp.transpose(dags, (1, 0, 2)).astype(jnp.float32)
    x = jnp.pad(x, ((0, 0), (0, b_pad - batch), (0, in_pad - input_size)))

    # Packed lane-dense start state: (b_pad, 2*L*H) = [h_l0..h_lL-1|c_l0..c_lL-1].
    def _pack(s):
        s = jnp.transpose(s.astype(jnp.float32), (1, 0, 2))
        s = s.reshape(batch, n_layers * hidden)
        return jnp.pad(s, ((0, b_pad - batch), (0, 0)))
    s0 = jnp.concatenate([_pack(h0), _pack(c0)], axis=-1)

    # Weights (gate order [i,f,o,2*g], transposed), padded/broadcast host-side.
    wih0 = jnp.pad(params["w_ih0"], ((0, in_pad - input_size), (0, 0)))
    wihs = params["w_ih"]                          # (L, H, 4H) bf16 (slot 0 unused)
    whhs = params["w_hh"]                          # (L, H, 4H) bf16
    bias = jnp.broadcast_to(params["bias"][:, None, :],
                            (n_layers, b_pad, 4 * hidden)).astype(jnp.float32)

    pred_tbl, deg_tbl = _build_pred_tables(dag_structure)
    max_deg = int(pred_tbl.shape[1])
    kernel = _make_dag_lstm_kernel(num_nodes, n_layers, b_pad, hidden, max_deg)

    c2 = lambda i, pred, deg: (0, 0)               # single grid step: all-resident
    c3 = lambda i, pred, deg: (0, 0, 0)

    grid_spec = pltpu.PrefetchScalarGridSpec(
        num_scalar_prefetch=2,
        grid=(1,),
        in_specs=[
            pl.BlockSpec(tuple(x.shape), c3),
            pl.BlockSpec(tuple(wih0.shape), c2),
            pl.BlockSpec(tuple(wihs.shape), c3),
            pl.BlockSpec(tuple(whhs.shape), c3),
            pl.BlockSpec(tuple(bias.shape), c3),
            pl.BlockSpec(tuple(s0.shape), c2),
        ],
        out_specs=pl.BlockSpec((b_pad, hidden), c2),
        scratch_shapes=[
            pltpu.VMEM((num_nodes + 1, b_pad, 2 * n_layers * hidden),
                       jnp.float32),
        ],
    )

    # VMEM budget derived from actual shapes (clamped to [32 MiB, 100 MiB]).
    def _bytes(a):
        return int(a.size) * a.dtype.itemsize
    state_bytes = (num_nodes + 1) * b_pad * 2 * n_layers * hidden * 4
    io_bytes = (sum(_bytes(a) for a in (x, wih0, wihs, whhs, bias, s0))
                + b_pad * hidden * 4)
    vmem_limit = int(min(100 * 2**20,
                         max(32 * 2**20, 2 * io_bytes + state_bytes + (2 << 20))))

    flops = 2 * num_nodes * n_layers * b_pad * (in_pad + hidden) * 4 * hidden
    transcendentals = num_nodes * n_layers * b_pad * 5 * hidden
    bytes_accessed = io_bytes

    out = pl.pallas_call(
        kernel,
        out_shape=jax.ShapeDtypeStruct((b_pad, hidden), jnp.float32),
        grid_spec=grid_spec,
        compiler_params=pltpu.CompilerParams(
            dimension_semantics=("arbitrary",),    # single sequential step
            vmem_limit_bytes=vmem_limit),
        cost_estimate=pl.CostEstimate(flops=flops,
                                      transcendentals=transcendentals,
                                      bytes_accessed=bytes_accessed),
    )(pred_tbl, deg_tbl, x, wih0, wihs, whhs, bias, s0)
    return out[:batch]


# ----------------------------------------------------------------------------
# Parameter init (nn.LSTM-style) + pure-JAX reference for correctness
# ----------------------------------------------------------------------------
def _prep_gates(a):
    """Leading axis is 4H in PyTorch [i,f,g,o] order -> [i,f,o,2*g].

    The g-gate pre-scale by 2 lets the kernel use a single sigmoid over all 4H
    lanes and recover tanh via tanh(z) = 2*sigmoid(2z) - 1.
    """
    h = a.shape[0] // 4
    return jnp.concatenate([a[:h], a[h:2 * h], a[3 * h:], 2.0 * a[2 * h:3 * h]],
                           axis=0)


def init_lstm_params(key, input_size, hidden_size, n_layers,
                     w_dtype=jnp.bfloat16):
    """U(-1/sqrt(H), 1/sqrt(H)) init; returns kernel-ready params (reordered,
    transposed, bf16 weights; f32 bias rows) and raw f32 weights for the ref."""
    bound = 1.0 / float(hidden_size) ** 0.5
    raw, wih, whh, bias = [], [], [], []
    wih0 = None
    for layer in range(n_layers):
        in_dim = input_size if layer == 0 else hidden_size
        key, k1, k2, k3, k4 = jax.random.split(key, 5)
        w_ih = jax.random.uniform(k1, (4 * hidden_size, in_dim), jnp.float32,
                                  -bound, bound)
        w_hh = jax.random.uniform(k2, (4 * hidden_size, hidden_size),
                                  jnp.float32, -bound, bound)
        b_ih = jax.random.uniform(k3, (4 * hidden_size,), jnp.float32,
                                  -bound, bound)
        b_hh = jax.random.uniform(k4, (4 * hidden_size,), jnp.float32,
                                  -bound, bound)
        raw.append({"w_ih": w_ih, "w_hh": w_hh, "b_ih": b_ih, "b_hh": b_hh})

        w_ih_p = _prep_gates(w_ih).T               # (in_dim, 4H)
        w_hh_p = _prep_gates(w_hh).T               # (H, 4H)
        b_p = _prep_gates(b_ih + b_hh)             # (4H,)
        if layer == 0:
            wih0 = w_ih_p
            wih.append(jnp.zeros((hidden_size, 4 * hidden_size), jnp.float32))
        else:
            wih.append(w_ih_p)
        whh.append(w_hh_p)
        bias.append(b_p)

    params = {"w_ih0": wih0.astype(w_dtype),
              "w_ih": jnp.stack(wih).astype(w_dtype),
              "w_hh": jnp.stack(whh).astype(w_dtype),
              "bias": jnp.stack(bias)}             # (L, 4H) f32
    return params, raw


def daglstm_reference(dags, dag_structure, lstm_start_state, raw_params):
    """Plain-JAX f32 reference mirroring DAGLSTMModule.forward."""
    h0, c0 = lstm_start_state
    n_layers, _, hidden = h0.shape
    states = {"inputs.0": (h0, c0)}
    out = None
    for i, preds in enumerate(dag_structure):
        x = dags[:, i, :]
        h_in = jnp.mean(jnp.stack([states[p][0] for p in preds]), axis=0)
        c_in = jnp.mean(jnp.stack([states[p][1] for p in preds]), axis=0)
        layer_in = x
        hs, cs = [], []
        for layer in range(n_layers):
            p = raw_params[layer]
            gates = (layer_in @ p["w_ih"].T + h_in[layer] @ p["w_hh"].T
                     + p["b_ih"] + p["b_hh"])
            i_g = jax.nn.sigmoid(gates[:, :hidden])
            f_g = jax.nn.sigmoid(gates[:, hidden:2 * hidden])
            g_g = jnp.tanh(gates[:, 2 * hidden:3 * hidden])
            o_g = jax.nn.sigmoid(gates[:, 3 * hidden:])
            c_new = f_g * c_in[layer] + i_g * g_g
            h_new = o_g * jnp.tanh(c_new)
            hs.append(h_new)
            cs.append(c_new)
            layer_in = h_new
        states[i] = (jnp.stack(hs), jnp.stack(cs))
        out = layer_in
    return out


if __name__ == "__main__":
    key = jax.random.PRNGKey(0)
    batch, input_size, hidden_size, n_layers = 2, 16, 32, 2
    # Small DAG: node 0 <- start state; nodes 1,2 <- node 0; node 3 <- {1, 2}.
    dag_structure = [["inputs.0"], [0], [0], [1, 2]]
    num_nodes = len(dag_structure)

    k_dag, k_h, k_c, k_p = jax.random.split(key, 4)
    dags = jax.random.normal(k_dag, (batch, num_nodes, input_size), jnp.float32)
    h0 = jax.random.normal(k_h, (n_layers, batch, hidden_size), jnp.float32)
    c0 = jax.random.normal(k_c, (n_layers, batch, hidden_size), jnp.float32)
    params, raw_params = init_lstm_params(k_p, input_size, hidden_size, n_layers)

    out = daglstm_forward(dags, dag_structure, (h0, c0), params)
    out = jax.block_until_ready(out)
    assert out.shape == (batch, hidden_size), out.shape
    assert bool(jnp.all(jnp.isfinite(out)))

    # Correctness vs f32 reference (bf16 MXU + f32 accumulation -> loose tol).
    ref = daglstm_reference(dags, dag_structure, (h0, c0), raw_params)
    assert bool(jnp.allclose(out, ref, atol=5e-2, rtol=5e-2)), (
        float(jnp.max(jnp.abs(out - ref))))

    print("KERNEL_OK")
</pallas_src>

<mosaic_0001>
module attributes {stable_mosaic.version = 11 : i64} {
  func.func @kernel(%arg0: i32, %arg1: memref<4x2xi32, #tpu.memory_space<smem>>, %arg2: memref<4xi32, #tpu.memory_space<smem>>, %arg3: memref<4x8x16xf32, #tpu.memory_space<vmem>>, %arg4: memref<16x128xbf16, #tpu.memory_space<vmem>>, %arg5: memref<2x32x128xbf16, #tpu.memory_space<vmem>>, %arg6: memref<2x32x128xbf16, #tpu.memory_space<vmem>>, %arg7: memref<2x8x128xf32, #tpu.memory_space<vmem>>, %arg8: memref<8x128xf32, #tpu.memory_space<vmem>>, %arg9: memref<8x32xf32, #tpu.memory_space<vmem>>, %arg10: memref<5x8x128xf32, #tpu.memory_space<vmem>>) attributes {dimension_semantics = [#tpu.dimension_semantics<arbitrary>], iteration_bounds = array<i64: 1>, scalar_prefetch = 2 : i64, scratch_operands = 1 : i64, tpu.core_type = #tpu.core_type<tc>, window_params = [{pipeline_mode = #tpu.pipeline_mode<synchronous>, transform_indices = @transform_0, window_bounds = array<i64: 4, 8, 16>}, {pipeline_mode = #tpu.pipeline_mode<synchronous>, transform_indices = @transform_1, window_bounds = array<i64: 16, 128>}, {pipeline_mode = #tpu.pipeline_mode<synchronous>, transform_indices = @transform_2, window_bounds = array<i64: 2, 32, 128>}, {pipeline_mode = #tpu.pipeline_mode<synchronous>, transform_indices = @transform_3, window_bounds = array<i64: 2, 32, 128>}, {pipeline_mode = #tpu.pipeline_mode<synchronous>, transform_indices = @transform_4, window_bounds = array<i64: 2, 8, 128>}, {pipeline_mode = #tpu.pipeline_mode<synchronous>, transform_indices = @transform_5, window_bounds = array<i64: 8, 128>}, {pipeline_mode = #tpu.pipeline_mode<synchronous>, transform_indices = @transform_6, window_bounds = array<i64: 8, 32>}]} {
    %c0 = arith.constant 0 : index
    %c0_0 = arith.constant 0 : index
    %0 = vector.load %arg8[%c0, %c0_0] : memref<8x128xf32, #tpu.memory_space<vmem>>, vector<8x128xf32>
    %c0_1 = arith.constant 0 : index
    %c0_2 = arith.constant 0 : index
    %c0_3 = arith.constant 0 : index
    %1 = vector.load %arg10[%c0_1, %c0_2, %c0_3] : memref<5x8x128xf32, #tpu.memory_space<vmem>>, vector<1x8x128xf32>
    %2 = vector.shape_cast %1 : vector<1x8x128xf32> to vector<8x128xf32>
    %3 = vector.shape_cast %0 : vector<8x128xf32> to vector<1x8x128xf32>
    tpu.vector_store %arg10[%c0_1, %c0_2, %c0_3], %3 {strides = array<i32>} : memref<5x8x128xf32, #tpu.memory_space<vmem>>, vector<1x8x128xf32>,
    %c0_i32 = arith.constant 0 : i32
    %c4_i32 = arith.constant 4 : i32
    %4 = arith.addi %c0_i32, %c4_i32 : i32
    %c1_i32 = arith.constant 1 : i32
    scf.for %arg11 = %c0_i32 to %4 step %c1_i32  : i32 {
      %c1_i32_8 = arith.constant 1 : i32
      %8 = arith.muli %arg11, %c1_i32_8 : i32
      %c0_i32_9 = arith.constant 0 : i32
      %9 = arith.addi %c0_i32_9, %8 : i32
      %10 = arith.index_cast %9 : i32 to index
      %11 = memref.load %arg2[%10] : memref<4xi32, #tpu.memory_space<smem>>
      %c1_i32_10 = arith.constant 1 : i32
      %12 = arith.maxsi %11, %c1_i32_10 : i32
      %13 = arith.sitofp %12 : i32 to f32
      %cst = arith.constant 1.000000e+00 : f32
      %14 = arith.divf %cst, %13 : f32
      %cst_11 = arith.constant 0.000000e+00 : f32
      %15 = vector.broadcast %cst_11 : f32 to vector<8x128xf32>
      %16 = arith.index_cast %9 : i32 to index
      %c0_12 = arith.constant 0 : index
      %17 = memref.load %arg1[%16, %c0_12] : memref<4x2xi32, #tpu.memory_space<smem>>
      %c0_i32_13 = arith.constant 0 : i32
      %18 = arith.cmpi sgt, %11, %c0_i32_13 : i32
      %cst_14 = arith.constant 0.000000e+00 : f32
      %19 = arith.select %18, %14, %cst_14 : f32
      %20 = arith.index_cast %17 : i32 to index
      %c0_15 = arith.constant 0 : index
      %c0_16 = arith.constant 0 : index
      %21 = vector.load %arg10[%20, %c0_15, %c0_16] : memref<5x8x128xf32, #tpu.memory_space<vmem>>, vector<1x8x128xf32>
      %22 = vector.shape_cast %21 : vector<1x8x128xf32> to vector<8x128xf32>
      %23 = vector.broadcast %19 : f32 to vector<8x128xf32>
      %24 = arith.mulf %23, %22 : vector<8x128xf32>
      %25 = arith.addf %15, %24 : vector<8x128xf32>
      %26 = arith.index_cast %9 : i32 to index
      %c1 = arith.constant 1 : index
      %27 = memref.load %arg1[%26, %c1] : memref<4x2xi32, #tpu.memory_space<smem>>
      %c1_i32_17 = arith.constant 1 : i32
      %28 = arith.cmpi sgt, %11, %c1_i32_17 : i32
      %cst_18 = arith.constant 0.000000e+00 : f32
      %29 = arith.select %28, %14, %cst_18 : f32
      %30 = arith.index_cast %27 : i32 to index
      %c0_19 = arith.constant 0 : index
      %c0_20 = arith.constant 0 : index
      %31 = vector.load %arg10[%30, %c0_19, %c0_20] : memref<5x8x128xf32, #tpu.memory_space<vmem>>, vector<1x8x128xf32>
      %32 = vector.shape_cast %31 : vector<1x8x128xf32> to vector<8x128xf32>
      %33 = vector.broadcast %29 : f32 to vector<8x128xf32>
      %34 = arith.mulf %33, %32 : vector<8x128xf32>
      %35 = arith.addf %25, %34 : vector<8x128xf32>
      %36 = arith.index_cast %9 : i32 to index
      %c0_21 = arith.constant 0 : index
      %c0_22 = arith.constant 0 : index
      %37 = vector.load %arg3[%36, %c0_21, %c0_22] : memref<4x8x16xf32, #tpu.memory_space<vmem>>, vector<1x8x16xf32>
      %38 = vector.shape_cast %37 : vector<1x8x16xf32> to vector<8x16xf32>
      %39 = vector.extract_strided_slice %35 {offsets = [0, 0], sizes = [8, 32], strides = [1, 1]} : vector<8x128xf32> to vector<8x32xf32>
      %40 = vector.extract_strided_slice %35 {offsets = [0, 64], sizes = [8, 32], strides = [1, 1]} : vector<8x128xf32> to vector<8x32xf32>
      %41 = arith.truncf %38 : vector<8x16xf32> to vector<8x16xbf16>
      %c0_23 = arith.constant 0 : index
      %c0_24 = arith.constant 0 : index
      %42 = vector.load %arg4[%c0_23, %c0_24] : memref<16x128xbf16, #tpu.memory_space<vmem>>, vector<16x128xbf16>
      %cst_25 = arith.constant dense<0.000000e+00> : vector<8x128xf32>
      %43 = tpu.matmul %41, %42, %cst_25 {dimension_numbers = #tpu.dot_dimension_numbers<[1], [0], [0], [1], [0, 0, 1, 1], [], []>} : vector<8x16xbf16>, vector<16x128xbf16>, vector<8x128xf32> -> vector<8x128xf32>
      %44 = arith.truncf %39 : vector<8x32xf32> to vector<8x32xbf16>
      %c0_26 = arith.constant 0 : index
      %c0_27 = arith.constant 0 : index
      %c0_28 = arith.constant 0 : index
      %45 = vector.load %arg6[%c0_26, %c0_27, %c0_28] : memref<2x32x128xbf16, #tpu.memory_space<vmem>>, vector<1x32x128xbf16>
      %46 = vector.shape_cast %45 : vector<1x32x128xbf16> to vector<32x128xbf16>
      %cst_29 = arith.constant dense<0.000000e+00> : vector<8x128xf32>
      %47 = tpu.matmul %44, %46, %cst_29 {dimension_numbers = #tpu.dot_dimension_numbers<[1], [0], [0], [1], [0, 0, 1, 1], [], []>} : vector<8x32xbf16>, vector<32x128xbf16>, vector<8x128xf32> -> vector<8x128xf32>
      %48 = arith.addf %43, %47 : vector<8x128xf32>
      %c0_30 = arith.constant 0 : index
      %c0_31 = arith.constant 0 : index
      %c0_32 = arith.constant 0 : index
      %49 = vector.load %arg7[%c0_30, %c0_31, %c0_32] : memref<2x8x128xf32, #tpu.memory_space<vmem>>, vector<1x8x128xf32>
      %50 = vector.shape_cast %49 : vector<1x8x128xf32> to vector<8x128xf32>
      %51 = arith.addf %48, %50 : vector<8x128xf32>
      %52 = arith.negf %51 : vector<8x128xf32>
      %53 = math.exp %52 : vector<8x128xf32>
      %cst_33 = arith.constant 1.000000e+00 : f32
      %54 = vector.broadcast %cst_33 : f32 to vector<8x128xf32>
      %55 = arith.addf %54, %53 : vector<8x128xf32>
      %56 = arith.divf %54, %55 : vector<8x128xf32>
      %57 = vector.extract_strided_slice %56 {offsets = [0, 0], sizes = [8, 32], strides = [1, 1]} : vector<8x128xf32> to vector<8x32xf32>
      %58 = vector.extract_strided_slice %56 {offsets = [0, 32], sizes = [8, 32], strides = [1, 1]} : vector<8x128xf32> to vector<8x32xf32>
      %59 = vector.extract_strided_slice %56 {offsets = [0, 64], sizes = [8, 32], strides = [1, 1]} : vector<8x128xf32> to vector<8x32xf32>
      %60 = vector.extract_strided_slice %56 {offsets = [0, 96], sizes = [8, 32], strides = [1, 1]} : vector<8x128xf32> to vector<8x32xf32>
      %cst_34 = arith.constant 2.000000e+00 : f32
      %61 = vector.broadcast %cst_34 : f32 to vector<8x32xf32>
      %62 = arith.mulf %61, %60 : vector<8x32xf32>
      %cst_35 = arith.constant 1.000000e+00 : f32
      %63 = vector.broadcast %cst_35 : f32 to vector<8x32xf32>
      %64 = arith.subf %62, %63 : vector<8x32xf32>
      %65 = arith.mulf %58, %40 : vector<8x32xf32>
      %66 = arith.mulf %57, %64 : vector<8x32xf32>
      %67 = arith.addf %65, %66 : vector<8x32xf32>
      %68 = math.tanh %67 : vector<8x32xf32>
      %69 = arith.mulf %59, %68 : vector<8x32xf32>
      %70 = vector.extract_strided_slice %35 {offsets = [0, 32], sizes = [8, 32], strides = [1, 1]} : vector<8x128xf32> to vector<8x32xf32>
      %71 = vector.extract_strided_slice %35 {offsets = [0, 96], sizes = [8, 32], strides = [1, 1]} : vector<8x128xf32> to vector<8x32xf32>
      %72 = arith.truncf %69 : vector<8x32xf32> to vector<8x32xbf16>
      %c1_36 = arith.constant 1 : index
      %c0_37 = arith.constant 0 : index
      %c0_38 = arith.constant 0 : index
      %73 = vector.load %arg5[%c1_36, %c0_37, %c0_38] : memref<2x32x128xbf16, #tpu.memory_space<vmem>>, vector<1x32x128xbf16>
      %74 = vector.shape_cast %73 : vector<1x32x128xbf16> to vector<32x128xbf16>
      %cst_39 = arith.constant dense<0.000000e+00> : vector<8x128xf32>
      %75 = tpu.matmul %72, %74, %cst_39 {dimension_numbers = #tpu.dot_dimension_numbers<[1], [0], [0], [1], [0, 0, 1, 1], [], []>} : vector<8x32xbf16>, vector<32x128xbf16>, vector<8x128xf32> -> vector<8x128xf32>
      %76 = arith.truncf %70 : vector<8x32xf32> to vector<8x32xbf16>
      %c1_40 = arith.constant 1 : index
      %c0_41 = arith.constant 0 : index
      %c0_42 = arith.constant 0 : index
      %77 = vector.load %arg6[%c1_40, %c0_41, %c0_42] : memref<2x32x128xbf16, #tpu.memory_space<vmem>>, vector<1x32x128xbf16>
      %78 = vector.shape_cast %77 : vector<1x32x128xbf16> to vector<32x128xbf16>
      %cst_43 = arith.constant dense<0.000000e+00> : vector<8x128xf32>
      %79 = tpu.matmul %76, %78, %cst_43 {dimension_numbers = #tpu.dot_dimension_numbers<[1], [0], [0], [1], [0, 0, 1, 1], [], []>} : vector<8x32xbf16>, vector<32x128xbf16>, vector<8x128xf32> -> vector<8x128xf32>
      %80 = arith.addf %75, %79 : vector<8x128xf32>
      %c1_44 = arith.constant 1 : index
      %c0_45 = arith.constant 0 : index
      %c0_46 = arith.constant 0 : index
      %81 = vector.load %arg7[%c1_44, %c0_45, %c0_46] : memref<2x8x128xf32, #tpu.memory_space<vmem>>, vector<1x8x128xf32>
      %82 = vector.shape_cast %81 : vector<1x8x128xf32> to vector<8x128xf32>
      %83 = arith.addf %80, %82 : vector<8x128xf32>
      %84 = arith.negf %83 : vector<8x128xf32>
      %85 = math.exp %84 : vector<8x128xf32>
      %cst_47 = arith.constant 1.000000e+00 : f32
      %86 = vector.broadcast %cst_47 : f32 to vector<8x128xf32>
      %87 = arith.addf %86, %85 : vector<8x128xf32>
      %88 = arith.divf %86, %87 : vector<8x128xf32>
      %89 = vector.extract_strided_slice %88 {offsets = [0, 0], sizes = [8, 32], strides = [1, 1]} : vector<8x128xf32> to vector<8x32xf32>
      %90 = vector.extract_strided_slice %88 {offsets = [0, 32], sizes = [8, 32], strides = [1, 1]} : vector<8x128xf32> to vector<8x32xf32>
      %91 = vector.extract_strided_slice %88 {offsets = [0, 64], sizes = [8, 32], strides = [1, 1]} : vector<8x128xf32> to vector<8x32xf32>
      %92 = vector.extract_strided_slice %88 {offsets = [0, 96], sizes = [8, 32], strides = [1, 1]} : vector<8x128xf32> to vector<8x32xf32>
      %cst_48 = arith.constant 2.000000e+00 : f32
      %93 = vector.broadcast %cst_48 : f32 to vector<8x32xf32>
      %94 = arith.mulf %93, %92 : vector<8x32xf32>
      %cst_49 = arith.constant 1.000000e+00 : f32
      %95 = vector.broadcast %cst_49 : f32 to vector<8x32xf32>
      %96 = arith.subf %94, %95 : vector<8x32xf32>
      %97 = arith.mulf %90, %71 : vector<8x32xf32>
      %98 = arith.mulf %89, %96 : vector<8x32xf32>
      %99 = arith.addf %97, %98 : vector<8x32xf32>
      %100 = math.tanh %99 : vector<8x32xf32>
      %101 = arith.mulf %91, %100 : vector<8x32xf32>
      %102 = tpu.concatenate %69, %101, %67, %99 in 1 : vector<8x32xf32>, vector<8x32xf32>, vector<8x32xf32>, vector<8x32xf32> -> vector<8x128xf32>
      %c1_i32_50 = arith.constant 1 : i32
      %103 = arith.addi %9, %c1_i32_50 : i32
      %104 = arith.index_cast %103 : i32 to index
      %c0_51 = arith.constant 0 : index
      %c0_52 = arith.constant 0 : index
      %105 = vector.load %arg10[%104, %c0_51, %c0_52] : memref<5x8x128xf32, #tpu.memory_space<vmem>>, vector<1x8x128xf32>
      %106 = vector.shape_cast %105 : vector<1x8x128xf32> to vector<8x128xf32>
      %107 = vector.shape_cast %102 : vector<8x128xf32> to vector<1x8x128xf32>
      tpu.vector_store %arg10[%104, %c0_51, %c0_52], %107 {strides = array<i32>} : memref<5x8x128xf32, #tpu.memory_space<vmem>>, vector<1x8x128xf32>,
    }
    %c4_i32_4 = arith.constant 4 : i32
    %c4 = arith.constant 4 : index
    %c0_5 = arith.constant 0 : index
    %c32 = arith.constant 32 : index
    %5 = vector.load %arg10[%c4, %c0_5, %c32] : memref<5x8x128xf32, #tpu.memory_space<vmem>>, vector<1x8x32xf32>
    %6 = vector.shape_cast %5 : vector<1x8x32xf32> to vector<8x32xf32>
    %c0_6 = arith.constant 0 : index
    %c0_7 = arith.constant 0 : index
    %7 = vector.load %arg9[%c0_6, %c0_7] : memref<8x32xf32, #tpu.memory_space<vmem>>, vector<8x32xf32>
    tpu.vector_store %arg9[%c0_6, %c0_7], %6 {strides = array<i32>} : memref<8x32xf32, #tpu.memory_space<vmem>>, vector<8x32xf32>,
    return
  }
  func.func @transform_0(%arg0: i32, %arg1: memref<4x2xi32, #tpu.memory_space<smem>>, %arg2: memref<4xi32, #tpu.memory_space<smem>>) -> (i32, i32, i32) {
    %c0_i32 = arith.constant 0 : i32
    %c0_i32_0 = arith.constant 0 : i32
    %c0_i32_1 = arith.constant 0 : i32
    %c0_i32_2 = arith.constant 0 : i32
    return %c0_i32, %c0_i32_0, %c0_i32_1 : i32, i32, i32
  }
  func.func @transform_1(%arg0: i32, %arg1: memref<4x2xi32, #tpu.memory_space<smem>>, %arg2: memref<4xi32, #tpu.memory_space<smem>>) -> (i32, i32) {
    %c0_i32 = arith.constant 0 : i32
    %c0_i32_0 = arith.constant 0 : i32
    %c0_i32_1 = arith.constant 0 : i32
    return %c0_i32, %c0_i32_0 : i32, i32
  }
  func.func @transform_2(%arg0: i32, %arg1: memref<4x2xi32, #tpu.memory_space<smem>>, %arg2: memref<4xi32, #tpu.memory_space<smem>>) -> (i32, i32, i32) {
    %c0_i32 = arith.constant 0 : i32
    %c0_i32_0 = arith.constant 0 : i32
    %c0_i32_1 = arith.constant 0 : i32
    %c0_i32_2 = arith.constant 0 : i32
    return %c0_i32, %c0_i32_0, %c0_i32_1 : i32, i32, i32
  }
  func.func @transform_3(%arg0: i32, %arg1: memref<4x2xi32, #tpu.memory_space<smem>>, %arg2: memref<4xi32, #tpu.memory_space<smem>>) -> (i32, i32, i32) {
    %c0_i32 = arith.constant 0 : i32
    %c0_i32_0 = arith.constant 0 : i32
    %c0_i32_1 = arith.constant 0 : i32
    %c0_i32_2 = arith.constant 0 : i32
    return %c0_i32, %c0_i32_0, %c0_i32_1 : i32, i32, i32
  }
  func.func @transform_4(%arg0: i32, %arg1: memref<4x2xi32, #tpu.memory_space<smem>>, %arg2: memref<4xi32, #tpu.memory_space<smem>>) -> (i32, i32, i32) {
    %c0_i32 = arith.constant 0 : i32
    %c0_i32_0 = arith.constant 0 : i32
    %c0_i32_1 = arith.constant 0 : i32
    %c0_i32_2 = arith.constant 0 : i32
    return %c0_i32, %c0_i32_0, %c0_i32_1 : i32, i32, i32
  }
  func.func @transform_5(%arg0: i32, %arg1: memref<4x2xi32, #tpu.memory_space<smem>>, %arg2: memref<4xi32, #tpu.memory_space<smem>>) -> (i32, i32) {
    %c0_i32 = arith.constant 0 : i32
    %c0_i32_0 = arith.constant 0 : i32
    %c0_i32_1 = arith.constant 0 : i32
    return %c0_i32, %c0_i32_0 : i32, i32
  }
  func.func @transform_6(%arg0: i32, %arg1: memref<4x2xi32, #tpu.memory_space<smem>>, %arg2: memref<4xi32, #tpu.memory_space<smem>>) -> (i32, i32) {
    %c0_i32 = arith.constant 0 : i32
    %c0_i32_0 = arith.constant 0 : i32
    %c0_i32_1 = arith.constant 0 : i32
    return %c0_i32, %c0_i32_0 : i32, i32
  }
}

</mosaic_0001>

<llo_original>
// kernel: tpu_custom_call.1
$region0: #{tpu_custom_call.1}
  #allocation0 [shape = 'u32[]', space=smem, size = 0x4, offset = 0x4, fixed_abs, tag = 'smem constant byte address 0x4 - core index']
  #allocation1 [shape = 'u32[72,128]{1,0:T(1,128)}', space=vmem, size = 0x9000, scoped, tag = 'internal scratch']
  #allocation2 [shape = 'f32[5,8,128]{2,1,0:T(8,128)}', space=vmem, size = 0x5000, scoped, tag = 'scratch operand']
  #allocation3 [shape = 's32[1]{0}', space=sflag, size = 0x4, scoped, tag = 'scoped memory for tpu_custom_call.1']
  #allocation4 [shape = 'u8[2048]{0}', space=smem, size = 0x800, scoped, tag = 'prefetched SMEM operand 0']
  #allocation5 [shape = 'u8[512]{0}', space=smem, size = 0x200, scoped, tag = 'prefetched SMEM operand 1']
  %s0 = inlined_call_operand.vmem [shape: s32[4,2], index: 0, kind: input, shape index: {}]
  %s1 = inlined_call_operand.hbm [shape: s32[4], index: 1, kind: input, shape index: {}]
  %s2 = inlined_call_operand.hbm [shape: f32[4,8,16], index: 2, kind: input, shape index: {}]
  %s3 = inlined_call_operand.vmem [shape: bf16[16,128], index: 3, kind: input, shape index: {}]
  %s4 = inlined_call_operand.hbm [shape: bf16[2,32,128], index: 4, kind: input, shape index: {}]
  %s5 = inlined_call_operand.hbm [shape: bf16[2,32,128], index: 5, kind: input, shape index: {}]
  %s6 = inlined_call_operand.hbm [shape: f32[2,8,128], index: 6, kind: input, shape index: {}]
  %s7 = inlined_call_operand.hbm [shape: f32[8,128], index: 7, kind: input, shape index: {}]
  %s8 = inlined_call_operand.hbm [shape: f32[8,32], index: 8, kind: output, shape index: {}]
  %s9 = sld [smem:[#allocation0]]
  $region61: #{tpu_custom_call.1} parent=0
    _
  %s11 = ssub.s32 1, %s9
  %s12 = scalar_select 0, %s11, %s9
  %s14 = sshll.u32 %s0, 4
  %s15 = int_to_ptr.vmem [resolvable:$true] %s14
  %17 = dma.vmem_to_smem %s15, 64, [#allocation4], [#allocation3]
  %s19 = sshll.u32 %s1, 4
  %s20 = int_to_ptr.hbm [resolvable:$true] %s19
  %22 = dma.hbm_to_smem %s20, 16, [#allocation5], [#allocation3]
  %24 = dma.done [#allocation3], 80
  %25 = sfence
  $region1: #{tpu_custom_call.1} parent=0
    #allocation6 [shape = 'u8[16384]{0}', space=vmem, size = 0x4000, scoped, tag = 'input window, operand 2, single buffered']
    #allocation7 [shape = 's32[1]{0}', space=sflag, size = 0x4, scoped, tag = 'scoped memory for tpu_custom_call.1']
    #allocation8 [shape = 's32[1]{0}', space=sflag, size = 0x4, scoped, tag = 'scoped memory for tpu_custom_call.1']
    #allocation9 [shape = 'u8[16384]{0}', space=vmem, size = 0x4000, scoped, tag = 'input window, operand 4, single buffered']
    #allocation10 [shape = 's32[1]{0}', space=sflag, size = 0x4, scoped, tag = 'scoped memory for tpu_custom_call.1']
    #allocation11 [shape = 'u8[16384]{0}', space=vmem, size = 0x4000, scoped, tag = 'input window, operand 5, single buffered']
    #allocation12 [shape = 'u8[8192]{0}', space=vmem, size = 0x2000, scoped, tag = 'input window, operand 6, single buffered']
    #allocation13 [shape = 's32[1]{0}', space=sflag, size = 0x4, scoped, tag = 'scoped memory for tpu_custom_call.1']
    #allocation14 [shape = 'u8[4096]{0}', space=vmem, size = 0x1000, scoped, tag = 'input window, operand 7, single buffered']
    #allocation15 [shape = 'u8[4096]{0}', space=vmem, size = 0x1000, scoped, tag = 'output window, operand 0, single buffered']
    %26 = vsyncpa [#allocation7], 0
    %27 = vsyncpa [#allocation10], 0
    %28 = vsyncpa [#allocation13], 0
    %29 = vsyncpa [#allocation8], 0
    // Predicated region
    $region2: #{tpu_custom_call.1} parent=1 // pred_check
      _
    $region3: #{tpu_custom_call.1} parent=1 // pred_check_branch
      %31 = sbr.rel (0) target = $region5
    $region4: #{tpu_custom_call.1} parent=1 // pred_region
      %33 = vsyncadd [#allocation7], 0
      %s34 = sshll.u32 %s2, 4
      %s35 = int_to_ptr.hbm [resolvable:$true] %s34
      %s36 = sshll.u32 [#allocation6], 4
      %s37 = int_to_ptr.vmem [resolvable:$true] %s36
      %42 = dma.hbm_to_vmem [thread:$0]  %s35, 512, %s37, [#allocation7], 128, 128, 8
    $region5: #{tpu_custom_call.1} parent=1 // pred_fallthru
      _
    // Predicated region
    $region6: #{tpu_custom_call.1} parent=1 // pred_check
      _
    $region7: #{tpu_custom_call.1} parent=1 // pred_check_branch
      %44 = sbr.rel (0) target = $region9
    $region8: #{tpu_custom_call.1} parent=1 // pred_region
      _
    $region9: #{tpu_custom_call.1} parent=1 // pred_fallthru
      _
    // Predicated region
    $region10: #{tpu_custom_call.1} parent=1 // pred_check
      _
    $region11: #{tpu_custom_call.1} parent=1 // pred_check_branch
      %46 = sbr.rel (0) target = $region13
    $region12: #{tpu_custom_call.1} parent=1 // pred_region
      %48 = vsyncadd [#allocation10], 0
      %s49 = sshll.u32 %s4, 4
      %s50 = int_to_ptr.hbm [resolvable:$true] %s49
      %s51 = sshll.u32 [#allocation9], 4
      %s52 = int_to_ptr.vmem [resolvable:$true] %s51
      %57 = dma.hbm_to_vmem [thread:$0]  %s50, 512, %s52, [#allocation10], 64, 64, 4
    $region13: #{tpu_custom_call.1} parent=1 // pred_fallthru
      _
    // Predicated region
    $region14: #{tpu_custom_call.1} parent=1 // pred_check
      _
    $region15: #{tpu_custom_call.1} parent=1 // pred_check_branch
      %59 = sbr.rel (0) target = $region17
    $region16: #{tpu_custom_call.1} parent=1 // pred_region
      %61 = vsyncadd [#allocation10], 0
      %s62 = sshll.u32 %s5, 4
      %s63 = int_to_ptr.hbm [resolvable:$true] %s62
      %s64 = sshll.u32 [#allocation11], 4
      %s65 = int_to_ptr.vmem [resolvable:$true] %s64
      %70 = dma.hbm_to_vmem [thread:$0]  %s63, 512, %s65, [#allocation10], 64, 64, 4
    $region17: #{tpu_custom_call.1} parent=1 // pred_fallthru
      _
    // Predicated region
    $region18: #{tpu_custom_call.1} parent=1 // pred_check
      _
    $region19: #{tpu_custom_call.1} parent=1 // pred_check_branch
      %72 = sbr.rel (0) target = $region21
    $region20: #{tpu_custom_call.1} parent=1 // pred_region
      %74 = vsyncadd [#allocation13], 0
      %s75 = sshll.u32 %s6, 4
      %s76 = int_to_ptr.hbm [resolvable:$true] %s75
      %s77 = sshll.u32 [#allocation12], 4
      %s78 = int_to_ptr.vmem [resolvable:$true] %s77
      %83 = dma.hbm_to_vmem [thread:$0]  %s76, 256, %s78, [#allocation13], 128, 128, 8
    $region21: #{tpu_custom_call.1} parent=1 // pred_fallthru
      _
    // Predicated region
    $region22: #{tpu_custom_call.1} parent=1 // pred_check
      _
    $region23: #{tpu_custom_call.1} parent=1 // pred_check_branch
      %85 = sbr.rel (0) target = $region25
    $region24: #{tpu_custom_call.1} parent=1 // pred_region
      %87 = vsyncadd [#allocation13], 0
      %s89 = sshll.u32 %s7, 4
      %s90 = int_to_ptr.hbm [resolvable:$true] %s89
      %s91 = sshll.u32 [#allocation14], 4
      %s92 = int_to_ptr.vmem [resolvable:$true] %s91
      %94 = dma.hbm_to_vmem [thread:$0]  %s90, 128, %s92, [#allocation13]
    $region25: #{tpu_custom_call.1} parent=1 // pred_fallthru
      _
    // Predicated region
    $region26: #{tpu_custom_call.1} parent=1 // pred_check
      _
    $region27: #{tpu_custom_call.1} parent=1 // pred_check_branch
      %96 = sbr.rel (0) target = $region29
    $region28: #{tpu_custom_call.1} parent=1 // pred_region
      %98 = dma.done [#allocation7], 512
    $region29: #{tpu_custom_call.1} parent=1 // pred_fallthru
      _
    // Predicated region
    $region30: #{tpu_custom_call.1} parent=1 // pred_check
      _
    $region31: #{tpu_custom_call.1} parent=1 // pred_check_branch
      %100 = sbr.rel (0) target = $region33
    $region32: #{tpu_custom_call.1} parent=1 // pred_region
      %102 = dma.done [#allocation10], 512
    $region33: #{tpu_custom_call.1} parent=1 // pred_fallthru
      _
    // Predicated region
    $region34: #{tpu_custom_call.1} parent=1 // pred_check
      _
    $region35: #{tpu_custom_call.1} parent=1 // pred_check_branch
      %104 = sbr.rel (0) target = $region37
    $region36: #{tpu_custom_call.1} parent=1 // pred_region
      %106 = dma.done [#allocation10], 512
    $region37: #{tpu_custom_call.1} parent=1 // pred_fallthru
      _
    // Predicated region
    $region38: #{tpu_custom_call.1} parent=1 // pred_check
      _
    $region39: #{tpu_custom_call.1} parent=1 // pred_check_branch
      %108 = sbr.rel (0) target = $region41
    $region40: #{tpu_custom_call.1} parent=1 // pred_region
      %110 = dma.done [#allocation13], 256
    $region41: #{tpu_custom_call.1} parent=1 // pred_fallthru
      _
    // Predicated region
    $region42: #{tpu_custom_call.1} parent=1 // pred_check
      _
    $region43: #{tpu_custom_call.1} parent=1 // pred_check_branch
      %112 = sbr.rel (0) target = $region45
    $region44: #{tpu_custom_call.1} parent=1 // pred_region
      %114 = dma.done [#allocation13], 128
    $region45: #{tpu_custom_call.1} parent=1 // pred_fallthru
      _
    %v116 = vld [vmem:[#allocation14] sm:$0xff]
    %117 = vst [vmem:[#allocation2] sm:$0xff] %v116
    loop: start=0, step=1, limit=4
    $region46: #{tpu_custom_call.1} parent=1 // loop_pre_header
      _
    $region47: #{tpu_custom_call.1} parent=1 // loop_header
      %s119 = sphi 0, %s123
      %p120 = scmp.ge.s32.totalorder %s119, 4
    $region48: #{tpu_custom_call.1} parent=1 // loop_header_branch
      %122 = sbr.rel (%p120) target = $region52
    $region49: #{tpu_custom_call.1} parent=1 // loop_body
      %s124 = sld [smem:[#allocation5 + %s119]]
      %p125 = scmp.gt.s32.totalorder %s124, 1
      %s126 = scalar_select %p125, %s124, 1
      %s127 = scvt.s32.f32 %s126
      %v128 = vstv %s127
      %v129 = vrcp.pop %v128
      %v130 = vmul.f32 %v128, %v129
      %v131 = vsub.f32 1.0, %v130
      %v132 = vmul.f32 %v129, %v131
      %v133 = vadd.f32 %v129, %v132
      %vm134 = vweird.f32 %v128
      %vm135 = vweird.f32 %v129
      %vm136 = vmor %vm134, %vm135
      %v137 = vsel %vm136, %v129, %v133
      %v138 = vand.u32 2147483647, %v128
      %vm139 = vcmp.eq.f32.partialorder %v138, 8.507059e+37
      %v140 = vand.u32 %v128, 2147483648
      %v141 = vor.u32 1.1754944e-38, %v140
      %v142 = vsel %vm139, %v141, %v137
      %s143 = vtos %v142
      %s144 = smul.u32 %s119, 128
      %s145 = sld [smem:[#allocation4 + %s144]]
      %p146 = scmp.gt.s32.totalorder %s124, 0
      %s147 = scalar_select %p146, %s143, 0.0
      %s148 = smul.u32 %s145, 8
      %s149 = scalar_lea.vmem [#allocation2], %s148
      %v150 = vld [vmem:[%s149] sm:$0xff]
      %v151 = vstv %s147
      %v152 = vmul.f32 %v151, %v150
      %v153 = vadd.f32 %v152, 0.0
      %s154 = sadd.s32 %s144, 1
      %s155 = sld [smem:[#allocation4 + %s154]]
      %p156 = scmp.gt.s32.totalorder %s124, 1
      %s157 = scalar_select %p156, %s143, 0.0
      %s158 = smul.u32 %s155, 8
      %s159 = scalar_lea.vmem [#allocation2], %s158
      %v160 = vld [vmem:[%s159] sm:$0xff]
      %v161 = vstv %s157
      %v162 = vmul.f32 %v161, %v160
      %v163 = vadd.f32 %v153, %v162
      %s164 = smul.u32 %s119, 8
      %s165 = scalar_lea.vmem [#allocation6], %s164
      %v166 = vld [vmem:[%s165] sm:$0xff]
      %v167 = vpack.c.bf16 %v166, %v166
      %v168 = vld [vmem:[%s3] sm:$0xf]
      %v169 = vld [vmem:[%s3 + $0x4] sm:$0xf]
      %v170 = vpack.c.bf16 %v163, %v163
      %v171 = vld [vmem:[#allocation11] sm:$0xf]
      %v172 = vld [vmem:[#allocation11 + $0x4] sm:$0xf]
      %v173 = vld [vmem:[#allocation11 + $0x8] sm:$0xf]
      %v174 = vld [vmem:[#allocation11 + $0xc] sm:$0xf]
      %v179 = vunpack.c.l.b16 %v171
      %v180 = vunpack.c.l.b16 %v172
      %v181 = vunpack.c.l.b16 %v173
      %v182 = vunpack.c.l.b16 %v174
      %v183 = vpack.c.b16 %v180, %v179
      %v184 = vpack.c.b16 %v182, %v181
      %vm187 = vcmask 261120
      %v189 = vsel %vm187, %v170, 0
      %191 = vmatpush.bf16.msra.mxu0 0
      %192 = vmatpush.bf16.msra.mxu0 0
      %193 = vmatpush.bf16.msra.mxu0 0
      %194 = vmatpush.bf16.msra.mxu0 0
      %195 = vmatpush.bf16.msra.mxu0 0
      %196 = vmatpush.bf16.msra.mxu0 0
      %197 = vmatpush.bf16.msra.mxu0 %v184
      %198 = vmatpush.bf16.msra.mxu0 %v183
      %199 = vmatmul.bf16.gmra.mxu0 %v189
      %v200 = vpop.f32.mrf.mxu0
      %v201 = vadd.f32 0.0, %v200
      %v202 = vpop.f32.mrf.mxu0
      %203 = vdwg.mxu0
      %v206 = vunpack.c.l.b16 %v168
      %v207 = vunpack.c.l.b16 %v169
      %v208 = vpack.c.b16 %v207, %v206
      %vm210 = vcmask 130048
      %v212 = vsel %vm210, %v167, 0
      %214 = vmatpush.bf16.msra.mxu0 0
      %215 = vmatpush.bf16.msra.mxu0 0
      %216 = vmatpush.bf16.msra.mxu0 0
      %217 = vmatpush.bf16.msra.mxu0 0
      %218 = vmatpush.bf16.msra.mxu0 0
      %219 = vmatpush.bf16.msra.mxu0 0
      %220 = vmatpush.bf16.msra.mxu0 0
      %221 = vmatpush.bf16.msra.mxu0 %v208
      %222 = vmatmul.bf16.gmra.mxu0 %v212
      %v223 = vpop.f32.mrf.mxu0
      %v224 = vadd.f32 %v201, %v223
      %v225 = vpop.f32.mrf.mxu0
      %226 = vdwg.mxu0
      %v227 = vld [vmem:[#allocation12] sm:$0xff]
      %v228 = vadd.f32 %v224, %v227
      %v229 = vxor.u32 %v228, 2147483648
      %v230 = vmul.f32 %v229, 1.442695
      %v231 = vpow.pop %v230
      %v232 = vadd.f32 %v231, 1.0
      %v233 = vrcp.pop %v232
      %v234 = vmul.f32 %v232, %v233
      %v235 = vsub.f32 1.0, %v234
      %v236 = vmul.f32 %v233, %v235
      %v237 = vadd.f32 %v233, %v236
      %vm238 = vweird.f32 %v232
      %vm239 = vweird.f32 %v233
      %vm240 = vmor %vm238, %vm239
      %v241 = vsel %vm240, %v233, %v237
      %v242 = vand.u32 2147483647, %v232
      %vm243 = vcmp.eq.f32.partialorder %v242, 8.507059e+37
      %v244 = vand.u32 %v232, 2147483648
      %v245 = vor.u32 1.1754944e-38, %v244
      %v246 = vsel %vm243, %v245, %v241
      %v247 = vmul.f32 1.0, %v246
      %v248 = vmul.f32 %v247, 2.0
      %v249 = vsub.f32 %v248, 1.0
      %251 = vrot.lane.b32.xlu0 %v163, 96
      %v252 = vpop.permute.xlu0 %251
      %v254 = vmul.f32 %v247, %v252
      %256 = vrot.lane.b32.xlu0 %v249, 32
      %v257 = vpop.permute.xlu0 %256
      %v259 = vmul.f32 %v247, %v257
      %261 = vrot.lane.b32.xlu0 %v259, 32
      %v262 = vpop.permute.xlu0 %261
      %v264 = vadd.f32 %v254, %v262
      %v265 = vtanh.pop %v264
      %267 = vrot.lane.b32.xlu0 %v265, 32
      %v268 = vpop.permute.xlu0 %267
      %v270 = vmul.f32 %v247, %v268
      %v271 = vpack.c.bf16 %v270, %v270
      %s272 = scalar_lea.vmem [#allocation9], 16
      %v273 = vld [vmem:[%s272] sm:$0xf]
      %v274 = vld [vmem:[%s272 + $0x4] sm:$0xf]
      %v275 = vld [vmem:[%s272 + $0x8] sm:$0xf]
      %v276 = vld [vmem:[%s272 + $0xc] sm:$0xf]
      %s277 = scalar_lea.vmem [#allocation11], 16
      %v278 = vld [vmem:[%s277] sm:$0xf]
      %v279 = vld [vmem:[%s277 + $0x4] sm:$0xf]
      %v280 = vld [vmem:[%s277 + $0x8] sm:$0xf]
      %v281 = vld [vmem:[%s277 + $0xc] sm:$0xf]
      %283 = vrot.lane.b32.xlu0 %v170, 96
      %v284 = vpop.permute.xlu0 %283
      %v289 = vunpack.c.l.b16 %v278
      %v290 = vunpack.c.l.b16 %v279
      %v291 = vunpack.c.l.b16 %v280
      %v292 = vunpack.c.l.b16 %v281
      %v293 = vpack.c.b16 %v290, %v289
      %v294 = vpack.c.b16 %v292, %v291
      %v298 = vsel %vm187, %v284, 0
      %300 = vmatpush.bf16.msra.mxu0 0
      %301 = vmatpush.bf16.msra.mxu0 0
      %302 = vmatpush.bf16.msra.mxu0 0
      %303 = vmatpush.bf16.msra.mxu0 0
      %304 = vmatpush.bf16.msra.mxu0 0
      %305 = vmatpush.bf16.msra.mxu0 0
      %306 = vmatpush.bf16.msra.mxu0 %v294
      %307 = vmatpush.bf16.msra.mxu0 %v293
      %308 = vmatmul.bf16.gmra.mxu0 %v298
      %v309 = vpop.f32.mrf.mxu0
      %v310 = vadd.f32 0.0, %v309
      %v311 = vpop.f32.mrf.mxu0
      %312 = vdwg.mxu0
      %314 = vrot.lane.b32.xlu0 %v271, 64
      %v315 = vpop.permute.xlu0 %314
      %v320 = vunpack.c.l.b16 %v273
      %v321 = vunpack.c.l.b16 %v274
      %v322 = vunpack.c.l.b16 %v275
      %v323 = vunpack.c.l.b16 %v276
      %v324 = vpack.c.b16 %v321, %v320
      %v325 = vpack.c.b16 %v323, %v322
      %v329 = vsel %vm187, %v315, 0
      %331 = vmatpush.bf16.msra.mxu0 0
      %332 = vmatpush.bf16.msra.mxu0 0
      %333 = vmatpush.bf16.msra.mxu0 0
      %334 = vmatpush.bf16.msra.mxu0 0
      %335 = vmatpush.bf16.msra.mxu0 0
      %336 = vmatpush.bf16.msra.mxu0 0
      %337 = vmatpush.bf16.msra.mxu0 %v325
      %338 = vmatpush.bf16.msra.mxu0 %v324
      %339 = vmatmul.bf16.gmra.mxu0 %v329
      %v340 = vpop.f32.mrf.mxu0
      %v341 = vadd.f32 %v310, %v340
      %v342 = vpop.f32.mrf.mxu0
      %343 = vdwg.mxu0
      %s344 = scalar_lea.vmem [#allocation12], 8
      %v345 = vld [vmem:[%s344] sm:$0xff]
      %v346 = vadd.f32 %v341, %v345
      %v347 = vxor.u32 %v346, 2147483648
      %v348 = vmul.f32 %v347, 1.442695
      %v349 = vpow.pop %v348
      %v350 = vadd.f32 %v349, 1.0
      %v351 = vrcp.pop %v350
      %v352 = vmul.f32 %v350, %v351
      %v353 = vsub.f32 1.0, %v352
      %v354 = vmul.f32 %v351, %v353
      %v355 = vadd.f32 %v351, %v354
      %vm356 = vweird.f32 %v350
      %vm357 = vweird.f32 %v351
      %vm358 = vmor %vm356, %vm357
      %v359 = vsel %vm358, %v351, %v355
      %v360 = vand.u32 2147483647, %v350
      %vm361 = vcmp.eq.f32.partialorder %v360, 8.507059e+37
      %v362 = vand.u32 %v350, 2147483648
      %v363 = vor.u32 1.1754944e-38, %v362
      %v364 = vsel %vm361, %v363, %v359
      %v365 = vmul.f32 1.0, %v364
      %v366 = vmul.f32 %v365, 2.0
      %v367 = vsub.f32 %v366, 1.0
      %368 = vrot.lane.b32.xlu0 %v163, 64
      %v369 = vpop.permute.xlu0 %368
      %v371 = vmul.f32 %v365, %v369
      %373 = vrot.lane.b32.xlu0 %v367, 32
      %v374 = vpop.permute.xlu0 %373
      %v376 = vmul.f32 %v365, %v374
      %378 = vrot.lane.b32.xlu0 %v376, 32
      %v379 = vpop.permute.xlu0 %378
      %v381 = vadd.f32 %v371, %v379
      %v382 = vtanh.pop %v381
      %384 = vrot.lane.b32.xlu0 %v382, 32
      %v385 = vpop.permute.xlu0 %384
      %v387 = vmul.f32 %v365, %v385
      %389 = vrot.lane.b32.xlu0 %v270, 64
      %v390 = vpop.permute.xlu0 %389
      %393 = vrot.lane.b32.xlu0 %v387, 96
      %v394 = vpop.permute.xlu0 %393
      %397 = vrot.lane.b32.xlu0 %v264, 32
      %v398 = vpop.permute.xlu0 %397
      %401 = vrot.lane.b32.xlu0 %v381, 64
      %v402 = vpop.permute.xlu0 %401
      %v404 = vsel %vm187, %v390, %v394
      %vm405 = vcmask 523264
      %v406 = vsel %vm405, %v404, %v398
      %vm407 = vcmask 785408
      %v408 = vsel %vm407, %v406, %v402
      %s409 = sadd.s32 %s119, 1
      %s410 = smul.u32 %s409, 8
      %s411 = scalar_lea.vmem [#allocation2], %s410
      %412 = vst [vmem:[%s411] sm:$0xff] %v408
    $region50: #{tpu_custom_call.1} parent=1 // loop_footer
      %s123 = sadd.s32 1, %s119
    $region51: #{tpu_custom_call.1} parent=1 // loop_footer_branch
      %118 = sbr.rel target = $region47
    $region52: #{tpu_custom_call.1} parent=1 // loop_exit
      _
    %s413 = scalar_lea.vmem [#allocation2], 32
    %v414 = vld [vmem:[%s413] sm:$0xff]
    %416 = vrot.lane.b32.xlu0 %v414, 96
    %v417 = vpop.permute.xlu0 %416
    %vm419 = vcmask 261120
    %420 = vst.msk [vmem:[#allocation15] sm:$0xff] %vm419, %v417
    // Predicated region
    $region53: #{tpu_custom_call.1} parent=1 // pred_check
      _
    $region54: #{tpu_custom_call.1} parent=1 // pred_check_branch
      %422 = sbr.rel (0) target = $region56
    $region55: #{tpu_custom_call.1} parent=1 // pred_region
      %424 = vsyncadd [#allocation8], 0
      %s426 = sshll.u32 [#allocation15], 4
      %s427 = int_to_ptr.vmem [resolvable:$true] %s426
      %s428 = sshll.u32 %s8, 4
      %s429 = int_to_ptr.hbm [resolvable:$true] %s428
      %431 = dma.vmem_to_hbm [thread:$0]  %s427, 128, %s429, [#allocation8]
    $region56: #{tpu_custom_call.1} parent=1 // pred_fallthru
      _
    // Predicated region
    $region57: #{tpu_custom_call.1} parent=1 // pred_check
      _
    $region58: #{tpu_custom_call.1} parent=1 // pred_check_branch
      %433 = sbr.rel (0) target = $region60
    $region59: #{tpu_custom_call.1} parent=1 // pred_region
      %435 = dma.done [#allocation8], 128
    $region60: #{tpu_custom_call.1} parent=1 // pred_fallthru
      _
    %436 = vsyncpa [#allocation7], 1
    %437 = vsyncpa [#allocation10], 1
    %438 = vsyncpa [#allocation13], 1
    %439 = vsyncpa [#allocation8], 1

</llo_original>
